<compile_context>
chip_gen: v5e
topology: v5e:2x2
jax: 0.10.0
libtpu: 0.0.40
codegen_flags: <defaults>
</compile_context>

<pallas_src>
import math
import functools

import jax
import jax.numpy as jnp
import numpy as np
from jax import lax
from jax.experimental import pallas as pl
from jax.experimental.pallas import tpu as pltpu

N_EMBD = 128          # n_embd from the PyTorch module
BLOCK_SIZE = 128      # max T supported by the module's tril buffer


def head_kernel(*refs, causal_mask, compute_dtype):
    """One grid step: bb sequences (bb, T, C) -> (bb, T, H).

    refs = (x_ref, w_ref[, bias_ref], o_ref, q_sc, k_sc, v_sc)
      x_ref   : (bb, T, C)   input block
      w_ref   : (C, 3H)      fused [Wq*scale | Wk | Wv] (resident; constant index_map)
      bias_ref: (T, T) f32   additive causal bias (only present when causal_mask)
      o_ref   : (bb, T, H)   output block
      q_sc/k_sc/v_sc : (bb, T, H) VMEM scratch in compute_dtype
    """
    if causal_mask:
        x_ref, w_ref, bias_ref, o_ref, q_sc, k_sc, v_sc = refs
    else:
        x_ref, w_ref, o_ref, q_sc, k_sc, v_sc = refs
        bias_ref = None

    bb, T, C = x_ref.shape
    H = q_sc.shape[-1]
    use_bf16 = compute_dtype == jnp.bfloat16

    # --- QKV projection: one tall-M (bb*T rows), N=3H matmul on the flattened slab. ---
    # (1/sqrt(H) is already folded into the Wq columns wrapper-side.)
    x2d = x_ref[...].reshape(bb * T, C).astype(compute_dtype)
    qkv = jnp.dot(x2d, w_ref[...], preferred_element_type=jnp.float32)   # (bb*T, 3H) f32
    q_sc[...] = qkv[:, 0 * H:1 * H].reshape(bb, T, H).astype(compute_dtype)
    k_sc[...] = qkv[:, 1 * H:2 * H].reshape(bb, T, H).astype(compute_dtype)
    v_sc[...] = qkv[:, 2 * H:3 * H].reshape(bb, T, H).astype(compute_dtype)

    # --- Attention, one sequence at a time: live score tile stays (T, T) regardless of bb. ---
    def attend(i, carry):
        q = q_sc[i]                                                        # (T, H)
        k = k_sc[i]                                                        # (T, H)
        v = v_sc[i]                                                        # (T, H)
        s = jnp.einsum("qh,kh->qk", q, k, preferred_element_type=jnp.float32)  # (T, T) f32
        if causal_mask:
            s = s + bias_ref[...]
        # numerically stable softmax in f32
        m = jnp.max(s, axis=-1, keepdims=True)
        p = jnp.exp(s - m)
        denom = jnp.sum(p, axis=-1, keepdims=True)
        p = p * pl.reciprocal(denom, approx=use_bf16)
        # TODO(synk): nn.Dropout(0.1) on the attention weights is an eval-mode identity here.
        out = jnp.dot(p.astype(compute_dtype), v, preferred_element_type=jnp.float32)
        o_ref[i] = out.astype(o_ref.dtype)
        return carry

    lax.fori_loop(0, bb, attend, 0, unroll=bool(bb <= 8))


def _pick_bb(B, T, target_rows=512):
    """Sequences fused per grid step.

    Target ~512 MXU rows per step (amortizes ~0.35us/step overhead and MXU ramp on
    v5e/v6e/v7x). The per-sequence attention loop keeps live vreg state independent of bb,
    and blocks stay far below VMEM limits (including v7x's 64 MiB). bb must divide B.
    """
    bb = max(1, min(B, target_rows // max(T, 1)))
    while B % bb != 0:
        bb -= 1
    return bb


def head_forward(x, wk, wq, wv, *, mask=False, compute_dtype=jnp.bfloat16):
    """x: (B, T, C) f32; wk/wq/wv: (C, H) f32 (transpose of PyTorch nn.Linear.weight).
    Returns (B, T, H) f32 attention output of a single head."""
    B, T, C = x.shape
    H = wk.shape[-1]
    assert C == N_EMBD and T <= BLOCK_SIZE

    # Fuse the three projections into one (C, 3H) weight, fold 1/sqrt(H) into Wq, and
    # pre-cast once in the wrapper (the fused weight is resident across grid steps).
    scale = H ** (-0.5)
    w_fused = jnp.concatenate([wq * scale, wk, wv], axis=1).astype(compute_dtype)

    bb = _pick_bb(B, T)
    grid = (B // bb,)

    kern = functools.partial(head_kernel, causal_mask=mask, compute_dtype=compute_dtype)

    in_specs = [
        pl.BlockSpec((bb, T, C), lambda b: (b, 0, 0)),
        pl.BlockSpec((C, 3 * H), lambda b: (0, 0)),
    ]
    inputs = [x, w_fused]
    if mask:
        # Precomputed additive causal bias; resident after the first DMA (constant index_map).
        rows = np.arange(T)[:, None]
        cols = np.arange(T)[None, :]
        bias = jnp.asarray(np.where(cols <= rows, 0.0, -1e30), dtype=jnp.float32)
        in_specs.append(pl.BlockSpec((T, T), lambda b: (0, 0)))
        inputs.append(bias)

    return pl.pallas_call(
        kern,
        out_shape=jax.ShapeDtypeStruct((B, T, H), jnp.float32),
        grid=grid,
        in_specs=in_specs,
        out_specs=pl.BlockSpec((bb, T, H), lambda b: (b, 0, 0)),
        scratch_shapes=[pltpu.VMEM((bb, T, H), compute_dtype) for _ in range(3)],
        compiler_params=pltpu.CompilerParams(dimension_semantics=("parallel",)),
    )(*inputs)


# ---------------- plain-JAX reference (f32, matches the PyTorch forward) ----------------
def reference_head(x, wk, wq, wv, *, mask=False):
    k = x @ wk
    q = x @ wq
    v = x @ wv
    wei = jnp.einsum("bth,bsh->bts", q, k) * (k.shape[-1] ** (-0.5))
    if mask:
        T = x.shape[1]
        tril = jnp.tril(jnp.ones((T, T), dtype=bool))
        wei = jnp.where(tril, wei, -jnp.inf)
    wei = jax.nn.softmax(wei, axis=-1)
    # dropout is identity in eval mode
    return jnp.einsum("bts,bsh->bth", wei, v)


if __name__ == "__main__":
    key = jax.random.PRNGKey(0)
    kx, kk, kq, kv = jax.random.split(key, 4)

    B, T, C, H = 2, 8, N_EMBD, 32  # head_size = n_embd // n_head (minGPT-style)

    x = jax.random.normal(kx, (B, T, C), jnp.float32)
    wk = jax.random.normal(kk, (C, H), jnp.float32) / math.sqrt(C)
    wq = jax.random.normal(kq, (C, H), jnp.float32) / math.sqrt(C)
    wv = jax.random.normal(kv, (C, H), jnp.float32) / math.sqrt(C)

    # f32 path (tight check of the kernel structure)
    out_f32 = jax.block_until_ready(head_forward(x, wk, wq, wv, mask=False,
                                                 compute_dtype=jnp.float32))
    ref = jax.block_until_ready(reference_head(x, wk, wq, wv, mask=False))
    np.testing.assert_allclose(np.asarray(out_f32), np.asarray(ref), rtol=2e-4, atol=2e-4)

    # bf16 fast path (default), mask=False (module default)
    out_bf16 = jax.block_until_ready(head_forward(x, wk, wq, wv, mask=False))
    np.testing.assert_allclose(np.asarray(out_bf16), np.asarray(ref), rtol=5e-2, atol=5e-2)

    # bf16 fast path with causal mask (mask=True branch of the module)
    out_mask = jax.block_until_ready(head_forward(x, wk, wq, wv, mask=True))
    ref_mask = jax.block_until_ready(reference_head(x, wk, wq, wv, mask=True))
    np.testing.assert_allclose(np.asarray(out_mask), np.asarray(ref_mask), rtol=5e-2, atol=5e-2)

    assert out_bf16.shape == (B, T, H)
    print("KERNEL_OK")
</pallas_src>

<mosaic_0001>
module attributes {stable_mosaic.version = 11 : i64} {
  func.func @head_kernel(%arg0: i32, %arg1: memref<2x8x128xf32, #tpu.memory_space<vmem>>, %arg2: memref<128x96xf32, #tpu.memory_space<vmem>>, %arg3: memref<2x8x32xf32, #tpu.memory_space<vmem>>, %arg4: memref<2x8x32xf32, #tpu.memory_space<vmem>>, %arg5: memref<2x8x32xf32, #tpu.memory_space<vmem>>, %arg6: memref<2x8x32xf32, #tpu.memory_space<vmem>>) attributes {dimension_semantics = [#tpu.dimension_semantics<parallel>], iteration_bounds = array<i64: 1>, scalar_prefetch = 0 : i64, scratch_operands = 3 : i64, tpu.core_type = #tpu.core_type<tc>, window_params = [{transform_indices = @transform_0, window_bounds = array<i64: 2, 8, 128>}, {pipeline_mode = #tpu.pipeline_mode<synchronous>, transform_indices = @transform_1, window_bounds = array<i64: 128, 96>}, {transform_indices = @transform_2, window_bounds = array<i64: 2, 8, 32>}]} {
    %c0 = arith.constant 0 : index
    %c0_0 = arith.constant 0 : index
    %c0_1 = arith.constant 0 : index
    %0 = vector.load %arg1[%c0, %c0_0, %c0_1] : memref<2x8x128xf32, #tpu.memory_space<vmem>>, vector<2x8x128xf32>
    %1 = vector.shape_cast %0 : vector<2x8x128xf32> to vector<16x128xf32>
    %c0_2 = arith.constant 0 : index
    %c0_3 = arith.constant 0 : index
    %2 = vector.load %arg2[%c0_2, %c0_3] : memref<128x96xf32, #tpu.memory_space<vmem>>, vector<128x96xf32>
    %cst = arith.constant dense<0.000000e+00> : vector<16x96xf32>
    %3 = tpu.matmul %1, %2, %cst {dimension_numbers = #tpu.dot_dimension_numbers<[1], [0], [0], [1], [0, 0, 1, 1], [], []>} : vector<16x128xf32>, vector<128x96xf32>, vector<16x96xf32> -> vector<16x96xf32>
    %4 = vector.extract_strided_slice %3 {offsets = [0, 0], sizes = [16, 32], strides = [1, 1]} : vector<16x96xf32> to vector<16x32xf32>
    %5 = vector.shape_cast %4 : vector<16x32xf32> to vector<2x8x32xf32>
    %c0_4 = arith.constant 0 : index
    %c0_5 = arith.constant 0 : index
    %c0_6 = arith.constant 0 : index
    %6 = vector.load %arg4[%c0_4, %c0_5, %c0_6] : memref<2x8x32xf32, #tpu.memory_space<vmem>>, vector<2x8x32xf32>
    tpu.vector_store %arg4[%c0_4, %c0_5, %c0_6], %5 {strides = array<i32>} : memref<2x8x32xf32, #tpu.memory_space<vmem>>, vector<2x8x32xf32>,
    %7 = vector.extract_strided_slice %3 {offsets = [0, 32], sizes = [16, 32], strides = [1, 1]} : vector<16x96xf32> to vector<16x32xf32>
    %8 = vector.shape_cast %7 : vector<16x32xf32> to vector<2x8x32xf32>
    %c0_7 = arith.constant 0 : index
    %c0_8 = arith.constant 0 : index
    %c0_9 = arith.constant 0 : index
    %9 = vector.load %arg5[%c0_7, %c0_8, %c0_9] : memref<2x8x32xf32, #tpu.memory_space<vmem>>, vector<2x8x32xf32>
    tpu.vector_store %arg5[%c0_7, %c0_8, %c0_9], %8 {strides = array<i32>} : memref<2x8x32xf32, #tpu.memory_space<vmem>>, vector<2x8x32xf32>,
    %10 = vector.extract_strided_slice %3 {offsets = [0, 64], sizes = [16, 32], strides = [1, 1]} : vector<16x96xf32> to vector<16x32xf32>
    %11 = vector.shape_cast %10 : vector<16x32xf32> to vector<2x8x32xf32>
    %c0_10 = arith.constant 0 : index
    %c0_11 = arith.constant 0 : index
    %c0_12 = arith.constant 0 : index
    %12 = vector.load %arg6[%c0_10, %c0_11, %c0_12] : memref<2x8x32xf32, #tpu.memory_space<vmem>>, vector<2x8x32xf32>
    tpu.vector_store %arg6[%c0_10, %c0_11, %c0_12], %11 {strides = array<i32>} : memref<2x8x32xf32, #tpu.memory_space<vmem>>, vector<2x8x32xf32>,
    %c0_i32 = arith.constant 0 : i32
    %13 = arith.index_cast %c0_i32 : i32 to index
    %c0_13 = arith.constant 0 : index
    %c0_14 = arith.constant 0 : index
    %14 = vector.load %arg4[%13, %c0_13, %c0_14] : memref<2x8x32xf32, #tpu.memory_space<vmem>>, vector<1x8x32xf32>
    %15 = vector.shape_cast %14 : vector<1x8x32xf32> to vector<8x32xf32>
    %16 = arith.index_cast %c0_i32 : i32 to index
    %c0_15 = arith.constant 0 : index
    %c0_16 = arith.constant 0 : index
    %17 = vector.load %arg5[%16, %c0_15, %c0_16] : memref<2x8x32xf32, #tpu.memory_space<vmem>>, vector<1x8x32xf32>
    %18 = vector.shape_cast %17 : vector<1x8x32xf32> to vector<8x32xf32>
    %19 = arith.index_cast %c0_i32 : i32 to index
    %c0_17 = arith.constant 0 : index
    %c0_18 = arith.constant 0 : index
    %20 = vector.load %arg6[%19, %c0_17, %c0_18] : memref<2x8x32xf32, #tpu.memory_space<vmem>>, vector<1x8x32xf32>
    %21 = vector.shape_cast %20 : vector<1x8x32xf32> to vector<8x32xf32>
    "tpu.trace_start"() <{level = 10 : i32, message = "qh,kh->qk"}> : () -> ()
    %cst_19 = arith.constant dense<0.000000e+00> : vector<8x8xf32>
    %22 = tpu.matmul %15, %18, %cst_19 {dimension_numbers = #tpu.dot_dimension_numbers<[1], [1], [0], [0], [0, 0, 1, 0], [], []>} : vector<8x32xf32>, vector<8x32xf32>, vector<8x8xf32> -> vector<8x8xf32>
    "tpu.trace_stop"() : () -> ()
    %cst_20 = arith.constant dense<0xFF800000> : vector<8xf32>
    %23 = vector.multi_reduction <maximumf>, %22, %cst_20 [1] : vector<8x8xf32> to vector<8xf32>
    %24 = vector.shape_cast %23 : vector<8xf32> to vector<8x1xf32>
    %25 = vector.broadcast %24 : vector<8x1xf32> to vector<8x8xf32>
    %26 = arith.subf %22, %25 : vector<8x8xf32>
    %27 = math.exp %26 : vector<8x8xf32>
    %cst_21 = arith.constant dense<0.000000e+00> : vector<8xf32>
    %28 = vector.multi_reduction <add>, %27, %cst_21 [1] : vector<8x8xf32> to vector<8xf32>
    %29 = vector.shape_cast %28 : vector<8xf32> to vector<8x1xf32>
    %30 = tpu.reciprocal %29 : vector<8x1xf32> -> vector<8x1xf32>
    %31 = vector.broadcast %30 : vector<8x1xf32> to vector<8x8xf32>
    %32 = arith.mulf %27, %31 : vector<8x8xf32>
    %cst_22 = arith.constant dense<0.000000e+00> : vector<8x32xf32>
    %33 = tpu.matmul %32, %21, %cst_22 {dimension_numbers = #tpu.dot_dimension_numbers<[1], [0], [0], [1], [0, 0, 1, 1], [], []>} : vector<8x8xf32>, vector<8x32xf32>, vector<8x32xf32> -> vector<8x32xf32>
    %34 = arith.index_cast %c0_i32 : i32 to index
    %c0_23 = arith.constant 0 : index
    %c0_24 = arith.constant 0 : index
    %35 = vector.load %arg3[%34, %c0_23, %c0_24] : memref<2x8x32xf32, #tpu.memory_space<vmem>>, vector<1x8x32xf32>
    %36 = vector.shape_cast %35 : vector<1x8x32xf32> to vector<8x32xf32>
    %37 = vector.shape_cast %33 : vector<8x32xf32> to vector<1x8x32xf32>
    tpu.vector_store %arg3[%34, %c0_23, %c0_24], %37 {strides = array<i32>} : memref<2x8x32xf32, #tpu.memory_space<vmem>>, vector<1x8x32xf32>,
    %c1_i32 = arith.constant 1 : i32
    %38 = arith.index_cast %c1_i32 : i32 to index
    %c0_25 = arith.constant 0 : index
    %c0_26 = arith.constant 0 : index
    %39 = vector.load %arg4[%38, %c0_25, %c0_26] : memref<2x8x32xf32, #tpu.memory_space<vmem>>, vector<1x8x32xf32>
    %40 = vector.shape_cast %39 : vector<1x8x32xf32> to vector<8x32xf32>
    %41 = arith.index_cast %c1_i32 : i32 to index
    %c0_27 = arith.constant 0 : index
    %c0_28 = arith.constant 0 : index
    %42 = vector.load %arg5[%41, %c0_27, %c0_28] : memref<2x8x32xf32, #tpu.memory_space<vmem>>, vector<1x8x32xf32>
    %43 = vector.shape_cast %42 : vector<1x8x32xf32> to vector<8x32xf32>
    %44 = arith.index_cast %c1_i32 : i32 to index
    %c0_29 = arith.constant 0 : index
    %c0_30 = arith.constant 0 : index
    %45 = vector.load %arg6[%44, %c0_29, %c0_30] : memref<2x8x32xf32, #tpu.memory_space<vmem>>, vector<1x8x32xf32>
    %46 = vector.shape_cast %45 : vector<1x8x32xf32> to vector<8x32xf32>
    "tpu.trace_start"() <{level = 10 : i32, message = "qh,kh->qk"}> : () -> ()
    %cst_31 = arith.constant dense<0.000000e+00> : vector<8x8xf32>
    %47 = tpu.matmul %40, %43, %cst_31 {dimension_numbers = #tpu.dot_dimension_numbers<[1], [1], [0], [0], [0, 0, 1, 0], [], []>} : vector<8x32xf32>, vector<8x32xf32>, vector<8x8xf32> -> vector<8x8xf32>
    "tpu.trace_stop"() : () -> ()
    %cst_32 = arith.constant dense<0xFF800000> : vector<8xf32>
    %48 = vector.multi_reduction <maximumf>, %47, %cst_32 [1] : vector<8x8xf32> to vector<8xf32>
    %49 = vector.shape_cast %48 : vector<8xf32> to vector<8x1xf32>
    %50 = vector.broadcast %49 : vector<8x1xf32> to vector<8x8xf32>
    %51 = arith.subf %47, %50 : vector<8x8xf32>
    %52 = math.exp %51 : vector<8x8xf32>
    %cst_33 = arith.constant dense<0.000000e+00> : vector<8xf32>
    %53 = vector.multi_reduction <add>, %52, %cst_33 [1] : vector<8x8xf32> to vector<8xf32>
    %54 = vector.shape_cast %53 : vector<8xf32> to vector<8x1xf32>
    %55 = tpu.reciprocal %54 : vector<8x1xf32> -> vector<8x1xf32>
    %56 = vector.broadcast %55 : vector<8x1xf32> to vector<8x8xf32>
    %57 = arith.mulf %52, %56 : vector<8x8xf32>
    %cst_34 = arith.constant dense<0.000000e+00> : vector<8x32xf32>
    %58 = tpu.matmul %57, %46, %cst_34 {dimension_numbers = #tpu.dot_dimension_numbers<[1], [0], [0], [1], [0, 0, 1, 1], [], []>} : vector<8x8xf32>, vector<8x32xf32>, vector<8x32xf32> -> vector<8x32xf32>
    %59 = arith.index_cast %c1_i32 : i32 to index
    %c0_35 = arith.constant 0 : index
    %c0_36 = arith.constant 0 : index
    %60 = vector.load %arg3[%59, %c0_35, %c0_36] : memref<2x8x32xf32, #tpu.memory_space<vmem>>, vector<1x8x32xf32>
    %61 = vector.shape_cast %60 : vector<1x8x32xf32> to vector<8x32xf32>
    %62 = vector.shape_cast %58 : vector<8x32xf32> to vector<1x8x32xf32>
    tpu.vector_store %arg3[%59, %c0_35, %c0_36], %62 {strides = array<i32>} : memref<2x8x32xf32, #tpu.memory_space<vmem>>, vector<1x8x32xf32>,
    %c2_i32 = arith.constant 2 : i32
    return
  }
  func.func @transform_0(%arg0: i32) -> (i32, i32, i32) {
    %c0_i32 = arith.constant 0 : i32
    %c0_i32_0 = arith.constant 0 : i32
    %c0_i32_1 = arith.constant 0 : i32
    return %arg0, %c0_i32, %c0_i32_0 : i32, i32, i32
  }
  func.func @transform_1(%arg0: i32) -> (i32, i32) {
    %c0_i32 = arith.constant 0 : i32
    %c0_i32_0 = arith.constant 0 : i32
    %c0_i32_1 = arith.constant 0 : i32
    return %c0_i32, %c0_i32_0 : i32, i32
  }
  func.func @transform_2(%arg0: i32) -> (i32, i32, i32) {
    %c0_i32 = arith.constant 0 : i32
    %c0_i32_0 = arith.constant 0 : i32
    %c0_i32_1 = arith.constant 0 : i32
    return %arg0, %c0_i32, %c0_i32_0 : i32, i32, i32
  }
}

</mosaic_0001>

<llo_original>
// kernel: tpu_custom_call.1
$region0: #{tpu_custom_call.1}
  #allocation0 [shape = 'u32[]', space=smem, size = 0x4, offset = 0x4, fixed_abs, tag = 'smem constant byte address 0x4 - core index']
  #allocation1 [shape = 'u32[72,128]{1,0:T(1,128)}', space=vmem, size = 0x9000, scoped, tag = 'internal scratch']
  #allocation2 [shape = 'f32[2,8,32]{2,1,0:T(8,128)}', space=vmem, size = 0x2000, scoped, tag = 'scratch operand']
  #allocation3 [shape = 'f32[2,8,32]{2,1,0:T(8,128)}', space=vmem, size = 0x2000, scoped, tag = 'scratch operand']
  #allocation4 [shape = 'f32[2,8,32]{2,1,0:T(8,128)}', space=vmem, size = 0x2000, scoped, tag = 'scratch operand']
  %s0 = inlined_call_operand.vmem [shape: f32[2,8,128], index: 0, kind: input, shape index: {}]
  %s1 = inlined_call_operand.vmem [shape: f32[128,96], index: 1, kind: input, shape index: {}]
  %s2 = inlined_call_operand.hbm [shape: f32[2,8,32], index: 2, kind: output, shape index: {}]
  %s3 = sld [smem:[#allocation0]]
  $region18: #{tpu_custom_call.1} parent=0
    _
  %s5 = ssub.s32 1, %s3
  %s6 = scalar_select 0, %s5, %s3
  $region1: #{tpu_custom_call.1} parent=0
    #allocation5 [shape = 'u8[8192]{0}', space=vmem, size = 0x2000, scoped, tag = 'output window, operand 0, single buffered']
    #allocation6 [shape = 's32[1]{0}', space=sflag, size = 0x4, scoped, tag = 'scoped memory for tpu_custom_call.1']
    %7 = vsyncpa [#allocation6], 0
    // Predicated region
    $region2: #{tpu_custom_call.1} parent=1 // pred_check
      _
    $region3: #{tpu_custom_call.1} parent=1 // pred_check_branch
      %9 = sbr.rel (0) target = $region5
    $region4: #{tpu_custom_call.1} parent=1 // pred_region
      _
    $region5: #{tpu_custom_call.1} parent=1 // pred_fallthru
      _
    // Predicated region
    $region6: #{tpu_custom_call.1} parent=1 // pred_check
      _
    $region7: #{tpu_custom_call.1} parent=1 // pred_check_branch
      %11 = sbr.rel (0) target = $region9
    $region8: #{tpu_custom_call.1} parent=1 // pred_region
      _
    $region9: #{tpu_custom_call.1} parent=1 // pred_fallthru
      _
    %v12 = vld [vmem:[%s0] sm:$0xff]
    %v13 = vld [vmem:[%s0 + $0x8] sm:$0xff]
    %v14 = vld [vmem:[%s1] sm:$0xff]
    %v15 = vld [vmem:[%s1 + $0x8] sm:$0xff]
    %v16 = vld [vmem:[%s1 + $0x10] sm:$0xff]
    %v17 = vld [vmem:[%s1 + $0x18] sm:$0xff]
    %v18 = vld [vmem:[%s1 + $0x20] sm:$0xff]
    %v19 = vld [vmem:[%s1 + $0x28] sm:$0xff]
    %v20 = vld [vmem:[%s1 + $0x30] sm:$0xff]
    %v21 = vld [vmem:[%s1 + $0x38] sm:$0xff]
    %v22 = vld [vmem:[%s1 + $0x40] sm:$0xff]
    %v23 = vld [vmem:[%s1 + $0x48] sm:$0xff]
    %v24 = vld [vmem:[%s1 + $0x50] sm:$0xff]
    %v25 = vld [vmem:[%s1 + $0x58] sm:$0xff]
    %v26 = vld [vmem:[%s1 + $0x60] sm:$0xff]
    %v27 = vld [vmem:[%s1 + $0x68] sm:$0xff]
    %v28 = vld [vmem:[%s1 + $0x70] sm:$0xff]
    %v29 = vld [vmem:[%s1 + $0x78] sm:$0xff]
    %30 = vmatpush.msra.mxu0 %v29
    %31 = vmatpush.msra.mxu0 %v28
    %32 = vmatpush.msra.mxu0 %v27
    %33 = vmatpush.msra.mxu0 %v26
    %34 = vmatpush.msra.mxu0 %v25
    %35 = vmatpush.msra.mxu0 %v24
    %36 = vmatpush.msra.mxu0 %v23
    %37 = vmatpush.msra.mxu0 %v22
    %38 = vmatpush.msra.mxu0 %v21
    %39 = vmatpush.msra.mxu0 %v20
    %40 = vmatpush.msra.mxu0 %v19
    %41 = vmatpush.msra.mxu0 %v18
    %42 = vmatpush.msra.mxu0 %v17
    %43 = vmatpush.msra.mxu0 %v16
    %44 = vmatpush.msra.mxu0 %v15
    %45 = vmatpush.msra.mxu0 %v14
    %46 = vmatmul.f32.gmra.mxu0 %v12
    %v47 = vpop.f32.mrf.mxu0
    %v48 = vadd.f32 0.0, %v47
    %49 = vmatmul.f32.gmra.mxu0 %v13
    %v50 = vpop.f32.mrf.mxu0
    %v51 = vadd.f32 0.0, %v50
    %52 = vdwg.mxu0
    %vm53 = vcmask 261120
    %54 = vst.msk [vmem:[#allocation2] sm:$0xff] %vm53, %v48
    %55 = vst.msk [vmem:[#allocation2 + $0x8] sm:$0xff] %vm53, %v51
    %58 = vrot.lane.b32.xlu0 %v48, 96
    %v59 = vpop.permute.xlu0 %58
    %60 = vrot.lane.b32.xlu0 %v51, 96
    %v61 = vpop.permute.xlu0 %60
    %64 = vst.msk [vmem:[#allocation3] sm:$0xff] %vm53, %v59
    %65 = vst.msk [vmem:[#allocation3 + $0x8] sm:$0xff] %vm53, %v61
    %66 = vrot.lane.b32.xlu0 %v48, 64
    %v67 = vpop.permute.xlu0 %66
    %68 = vrot.lane.b32.xlu0 %v51, 64
    %v69 = vpop.permute.xlu0 %68
    %72 = vst.msk [vmem:[#allocation4] sm:$0xff] %vm53, %v67
    %73 = vst.msk [vmem:[#allocation4 + $0x8] sm:$0xff] %vm53, %v69
    %v74 = vld [vmem:[#allocation2] sm:$0xff]
    %v75 = vld [vmem:[#allocation3] sm:$0xff]
    %v76 = vld [vmem:[#allocation4] sm:$0xff]
    %v78 = vsel %vm53, %v74, 0
    %v81 = vsel %vm53, %v75, 0
    %83 = vmatpush.xpose.msra.mxu0 0.0
    %84 = vmatpush.xpose.msra.mxu0 0.0
    %85 = vmatpush.xpose.msra.mxu0 0.0
    %86 = vmatpush.xpose.msra.mxu0 0.0
    %87 = vmatpush.xpose.msra.mxu0 0.0
    %88 = vmatpush.xpose.msra.mxu0 0.0
    %89 = vmatpush.xpose.msra.mxu0 0.0
    %90 = vmatpush.xpose.msra.mxu0 0.0
    %91 = vmatpush.xpose.msra.mxu0 0.0
    %92 = vmatpush.xpose.msra.mxu0 0.0
    %93 = vmatpush.xpose.msra.mxu0 0.0
    %94 = vmatpush.xpose.msra.mxu0 0.0
    %95 = vmatpush.xpose.msra.mxu0 0.0
    %96 = vmatpush.xpose.msra.mxu0 0.0
    %97 = vmatpush.xpose.msra.mxu0 0.0
    %98 = vmatpush.xpose.msra.mxu0 %v81
    %99 = vmatmul.f32.gmra.mxu0 %v78
    %v100 = vpop.f32.mrf.mxu0
    %v101 = vadd.f32 0.0, %v100
    %102 = vdwg.mxu0
    %vm103 = vcmask 64512
    %v104 = vsel %vm103, %v101, -inf
    %105 = vmax.xlane.f32.xlu0 %v104
    %v106 = vpop.xlane.xlu0 %105
    %v107 = vsub.f32 %v101, %v106
    %v108 = vmul.f32 %v107, 1.442695
    %v109 = vpow.pop %v108
    %v110 = vsel %vm103, %v109, 0.0
    %111 = vadd.xlane.f32.xlu0 %v110
    %v112 = vpop.xlane.xlu0 %111
    %v113 = vrcp.pop %v112
    %v114 = vmul.f32 %v112, %v113
    %v115 = vsub.f32 1.0, %v114
    %v116 = vmul.f32 %v113, %v115
    %v117 = vadd.f32 %v113, %v116
    %vm118 = vweird.f32 %v112
    %vm119 = vweird.f32 %v113
    %vm120 = vmor %vm118, %vm119
    %v121 = vsel %vm120, %v113, %v117
    %v122 = vand.u32 2147483647, %v112
    %vm123 = vcmp.eq.f32.partialorder %v122, 8.507059e+37
    %v124 = vand.u32 %v112, 2147483648
    %v125 = vor.u32 1.1754944e-38, %v124
    %v126 = vsel %vm123, %v125, %v121
    %v127 = vmul.f32 %v109, %v126
    %v129 = vsel %vm103, %v127, 0
    %131 = vmatpush.msra.mxu0 0.0
    %132 = vmatpush.msra.mxu0 0.0
    %133 = vmatpush.msra.mxu0 0.0
    %134 = vmatpush.msra.mxu0 0.0
    %135 = vmatpush.msra.mxu0 0.0
    %136 = vmatpush.msra.mxu0 0.0
    %137 = vmatpush.msra.mxu0 0.0
    %138 = vmatpush.msra.mxu0 0.0
    %139 = vmatpush.msra.mxu0 0.0
    %140 = vmatpush.msra.mxu0 0.0
    %141 = vmatpush.msra.mxu0 0.0
    %142 = vmatpush.msra.mxu0 0.0
    %143 = vmatpush.msra.mxu0 0.0
    %144 = vmatpush.msra.mxu0 0.0
    %145 = vmatpush.msra.mxu0 0.0
    %146 = vmatpush.msra.mxu0 %v76
    %147 = vmatmul.f32.gmra.mxu0 %v129
    %v148 = vpop.f32.mrf.mxu0
    %v149 = vadd.f32 0.0, %v148
    %150 = vdwg.mxu0
    %151 = vst.msk [vmem:[#allocation5] sm:$0xff] %vm53, %v149
    %s152 = scalar_lea.vmem [#allocation2], 8
    %v153 = vld [vmem:[%s152] sm:$0xff]
    %s154 = scalar_lea.vmem [#allocation3], 8
    %v155 = vld [vmem:[%s154] sm:$0xff]
    %s156 = scalar_lea.vmem [#allocation4], 8
    %v157 = vld [vmem:[%s156] sm:$0xff]
    %v159 = vsel %vm53, %v153, 0
    %v162 = vsel %vm53, %v155, 0
    %164 = vmatpush.xpose.msra.mxu0 0.0
    %165 = vmatpush.xpose.msra.mxu0 0.0
    %166 = vmatpush.xpose.msra.mxu0 0.0
    %167 = vmatpush.xpose.msra.mxu0 0.0
    %168 = vmatpush.xpose.msra.mxu0 0.0
    %169 = vmatpush.xpose.msra.mxu0 0.0
    %170 = vmatpush.xpose.msra.mxu0 0.0
    %171 = vmatpush.xpose.msra.mxu0 0.0
    %172 = vmatpush.xpose.msra.mxu0 0.0
    %173 = vmatpush.xpose.msra.mxu0 0.0
    %174 = vmatpush.xpose.msra.mxu0 0.0
    %175 = vmatpush.xpose.msra.mxu0 0.0
    %176 = vmatpush.xpose.msra.mxu0 0.0
    %177 = vmatpush.xpose.msra.mxu0 0.0
    %178 = vmatpush.xpose.msra.mxu0 0.0
    %179 = vmatpush.xpose.msra.mxu0 %v162
    %180 = vmatmul.f32.gmra.mxu0 %v159
    %v181 = vpop.f32.mrf.mxu0
    %v182 = vadd.f32 0.0, %v181
    %183 = vdwg.mxu0
    %v184 = vsel %vm103, %v182, -inf
    %185 = vmax.xlane.f32.xlu0 %v184
    %v186 = vpop.xlane.xlu0 %185
    %v187 = vsub.f32 %v182, %v186
    %v188 = vmul.f32 %v187, 1.442695
    %v189 = vpow.pop %v188
    %v190 = vsel %vm103, %v189, 0.0
    %191 = vadd.xlane.f32.xlu0 %v190
    %v192 = vpop.xlane.xlu0 %191
    %v193 = vrcp.pop %v192
    %v194 = vmul.f32 %v192, %v193
    %v195 = vsub.f32 1.0, %v194
    %v196 = vmul.f32 %v193, %v195
    %v197 = vadd.f32 %v193, %v196
    %vm198 = vweird.f32 %v192
    %vm199 = vweird.f32 %v193
    %vm200 = vmor %vm198, %vm199
    %v201 = vsel %vm200, %v193, %v197
    %v202 = vand.u32 2147483647, %v192
    %vm203 = vcmp.eq.f32.partialorder %v202, 8.507059e+37
    %v204 = vand.u32 %v192, 2147483648
    %v205 = vor.u32 1.1754944e-38, %v204
    %v206 = vsel %vm203, %v205, %v201
    %v207 = vmul.f32 %v189, %v206
    %v209 = vsel %vm103, %v207, 0
    %211 = vmatpush.msra.mxu0 0.0
    %212 = vmatpush.msra.mxu0 0.0
    %213 = vmatpush.msra.mxu0 0.0
    %214 = vmatpush.msra.mxu0 0.0
    %215 = vmatpush.msra.mxu0 0.0
    %216 = vmatpush.msra.mxu0 0.0
    %217 = vmatpush.msra.mxu0 0.0
    %218 = vmatpush.msra.mxu0 0.0
    %219 = vmatpush.msra.mxu0 0.0
    %220 = vmatpush.msra.mxu0 0.0
    %221 = vmatpush.msra.mxu0 0.0
    %222 = vmatpush.msra.mxu0 0.0
    %223 = vmatpush.msra.mxu0 0.0
    %224 = vmatpush.msra.mxu0 0.0
    %225 = vmatpush.msra.mxu0 0.0
    %226 = vmatpush.msra.mxu0 %v157
    %227 = vmatmul.f32.gmra.mxu0 %v209
    %v228 = vpop.f32.mrf.mxu0
    %v229 = vadd.f32 0.0, %v228
    %230 = vdwg.mxu0
    %s231 = scalar_lea.vmem [#allocation5], 8
    %232 = vst.msk [vmem:[%s231] sm:$0xff] %vm53, %v229
    // Predicated region
    $region10: #{tpu_custom_call.1} parent=1 // pred_check
      _
    $region11: #{tpu_custom_call.1} parent=1 // pred_check_branch
      %234 = sbr.rel (0) target = $region13
    $region12: #{tpu_custom_call.1} parent=1 // pred_region
      %236 = vsyncadd [#allocation6], 0
      %s237 = sshll.u32 [#allocation5], 4
      %s238 = int_to_ptr.vmem [resolvable:$true] %s237
      %s239 = sshll.u32 %s2, 4
      %s240 = int_to_ptr.hbm [resolvable:$true] %s239
      %245 = dma.vmem_to_hbm [thread:$0]  %s238, 256, %s240, [#allocation6], 128, 128, 8
    $region13: #{tpu_custom_call.1} parent=1 // pred_fallthru
      _
    // Predicated region
    $region14: #{tpu_custom_call.1} parent=1 // pred_check
      _
    $region15: #{tpu_custom_call.1} parent=1 // pred_check_branch
      %247 = sbr.rel (0) target = $region17
    $region16: #{tpu_custom_call.1} parent=1 // pred_region
      %249 = dma.done [#allocation6], 256
    $region17: #{tpu_custom_call.1} parent=1 // pred_fallthru
      _
    %250 = vsyncpa [#allocation6], 1

</llo_original>
